<compile_context>
chip_gen: v6e
topology: v6e:2x2x1
jax: 0.10.0
libtpu: 0.0.40
codegen_flags: <defaults>
</compile_context>

<pallas_src>
import math

import jax
import jax.numpy as jnp
from jax.experimental import pallas as pl
from jax.experimental.pallas import tpu as pltpu

NEG_SLOPE = 0.01  # PyTorch nn.LeakyReLU default negative_slope


def pathway_mlp_kernel(x_ref, w1_ref, b1_ref, w2_ref, b2_ref, o_ref):
    """One grid step = one block of PP pathways.

    x_ref : [PP, B, in_dim]
    w1_ref: [PP, in_dim, hidden]   b1_ref: [PP, 1, hidden]
    w2_ref: [PP, hidden, out_dim]  b2_ref: [PP, 1, out_dim]
    o_ref : [1, B, PP*out_dim]     (lane-dense output slab)
    """
    x = x_ref[...]
    w1 = w1_ref[...]
    w2 = w2_ref[...]

    # First linear, batched over the pathway-block axis (single MXU call).
    h = jnp.einsum("pbi,pih->pbh", x, w1,
                   preferred_element_type=jnp.float32) + b1_ref[...]
    # LeakyReLU(0.01): one VALU max instead of compare+select.
    h = jnp.maximum(h, NEG_SLOPE * h)
    # Cast to weight dtype so bf16 weights use the full-rate MXU path.
    h = h.astype(w2.dtype)

    y = jnp.einsum("pbh,pho->pbo", h, w2,
                   preferred_element_type=jnp.float32) + b2_ref[...]

    # Lane-dense epilogue: [PP, B, out] -> [B, PP*out] so the HBM writeback is
    # a contiguous unmasked slab rather than masked sub-128-lane stores.
    pp, b, od = y.shape
    y = jnp.transpose(y, (1, 0, 2)).reshape(b, pp * od)
    o_ref[0] = y.astype(o_ref.dtype)


def _choose_pathway_block(n_pathways, bytes_per_pathway,
                          vmem_budget_bytes=24 * 1024 * 1024):
    """Largest divisor of P whose double-buffered footprint fits the VMEM
    budget, preferring >=2 grid steps so both v7x TensorCores get work."""
    max_pp = max(1, vmem_budget_bytes // max(1, 2 * bytes_per_pathway))
    divisors = [d for d in range(1, n_pathways + 1) if n_pathways % d == 0]
    fitting = [d for d in divisors if d <= max_pp] or [1]
    pp = max(fitting)
    if pp == n_pathways and n_pathways > 1:
        smaller = [d for d in fitting if d < n_pathways]
        if smaller:
            pp = max(smaller)
    return pp


def pathway_mlp_forward(x_bip, w1, b1, w2, b2):
    """x_bip: [B, in_dim, P] -> [B, out_dim, P]  (matches PyTorch PathwayMLP).

    Weights: w1 [P, in_dim, hidden], b1 [P, hidden],
             w2 [P, hidden, out_dim], b2 [P, out_dim].
    """
    B, in_dim, P = x_bip.shape
    hidden = w1.shape[-1]
    out_dim = w2.shape[-1]
    dtype = x_bip.dtype

    # Glue: pathway-major layout for the kernel.
    # TODO(synk): at production sizes, have the producer emit [P, B, in_dim]
    # directly to avoid this extra HBM round trip.
    x_pbi = jnp.transpose(x_bip, (2, 0, 1))          # [P, B, in_dim]
    b1_3d = b1.reshape(P, 1, hidden)
    b2_3d = b2.reshape(P, 1, out_dim)

    itemsize = jnp.dtype(dtype).itemsize
    bytes_per_pathway = itemsize * (
        B * in_dim + in_dim * hidden + hidden
        + hidden * out_dim + out_dim + B * out_dim)
    PP = _choose_pathway_block(P, bytes_per_pathway)
    n_blocks = P // PP

    out_blk = pl.pallas_call(
        pathway_mlp_kernel,
        out_shape=jax.ShapeDtypeStruct((n_blocks, B, PP * out_dim), dtype),
        grid_spec=pltpu.PrefetchScalarGridSpec(
            num_scalar_prefetch=0,
            grid=(n_blocks,),
            in_specs=[
                pl.BlockSpec((PP, B, in_dim), lambda p: (p, 0, 0)),
                pl.BlockSpec((PP, in_dim, hidden), lambda p: (p, 0, 0)),
                pl.BlockSpec((PP, 1, hidden), lambda p: (p, 0, 0)),
                pl.BlockSpec((PP, hidden, out_dim), lambda p: (p, 0, 0)),
                pl.BlockSpec((PP, 1, out_dim), lambda p: (p, 0, 0)),
            ],
            out_specs=pl.BlockSpec((1, B, PP * out_dim), lambda p: (p, 0, 0)),
        ),
        compiler_params=pltpu.CompilerParams(
            dimension_semantics=("parallel",),
            vmem_limit_bytes=48 * 1024 * 1024),
    )(x_pbi, w1, b1_3d, w2, b2_3d)

    # Undo the lane-dense packing: [nb, B, PP*out] -> [B, out_dim, P].
    out = out_blk.reshape(n_blocks, B, PP, out_dim)
    out = jnp.transpose(out, (1, 3, 0, 2)).reshape(B, out_dim, P)
    return out


def init_params(key, n_pathways, in_dim, hidden_dim, out_dim,
                dtype=jnp.float32):
    """Deterministic init matching PyTorch's PathwayMLP __init__.

    Linear weights: xavier_uniform_ (bound = sqrt(6/(fan_in+fan_out))).
    Linear biases : PyTorch default uniform(-1/sqrt(fan_in), 1/sqrt(fan_in)).
    Weights stored transposed ([in, out]) for row-vector matmul.
    """
    keys = jax.random.split(key, 4)

    def xavier(k, fan_in, fan_out, shape):
        bound = math.sqrt(6.0 / (fan_in + fan_out))
        return jax.random.uniform(k, shape, jnp.float32, -bound, bound)

    def bias(k, fan_in, shape):
        bound = 1.0 / math.sqrt(fan_in)
        return jax.random.uniform(k, shape, jnp.float32, -bound, bound)

    w1 = xavier(keys[0], in_dim, hidden_dim, (n_pathways, in_dim, hidden_dim))
    b1 = bias(keys[1], in_dim, (n_pathways, hidden_dim))
    w2 = xavier(keys[2], hidden_dim, out_dim, (n_pathways, hidden_dim, out_dim))
    b2 = bias(keys[3], hidden_dim, (n_pathways, out_dim))
    return (w1.astype(dtype), b1.astype(dtype),
            w2.astype(dtype), b2.astype(dtype))


if __name__ == "__main__":
    # Small shapes consistent with the module's forward.
    B, in_dim, hidden_dim, out_dim, n_pathways = 8, 16, 32, 8, 8

    key = jax.random.PRNGKey(0)
    k_x, k_p = jax.random.split(key)
    x = jax.random.normal(k_x, (B, in_dim, n_pathways), dtype=jnp.float32)
    w1, b1, w2, b2 = init_params(k_p, n_pathways, in_dim, hidden_dim, out_dim)

    out = pathway_mlp_forward(x, w1, b1, w2, b2)
    out = jax.block_until_ready(out)

    # Pure-JAX reference (same math, no Pallas).
    def ref(x_bip):
        outs = []
        for i in range(n_pathways):
            h = x_bip[:, :, i] @ w1[i] + b1[i]
            h = jnp.where(h > 0, h, NEG_SLOPE * h)
            outs.append((h @ w2[i] + b2[i])[:, :, None])
        return jnp.concatenate(outs, axis=-1)

    ref_out = ref(x)
    assert out.shape == (B, out_dim, n_pathways)
    assert jnp.allclose(out, ref_out, atol=1e-5, rtol=1e-5)

    print("KERNEL_OK")
</pallas_src>

<mosaic_0001>
module attributes {stable_mosaic.version = 11 : i64} {
  func.func @pathway_mlp_kernel(%arg0: i32, %arg1: memref<4x8x16xf32, #tpu.memory_space<vmem>>, %arg2: memref<4x16x32xf32, #tpu.memory_space<vmem>>, %arg3: memref<4x1x32xf32, #tpu.memory_space<vmem>>, %arg4: memref<4x32x8xf32, #tpu.memory_space<vmem>>, %arg5: memref<4x1x8xf32, #tpu.memory_space<vmem>>, %arg6: memref<1x8x32xf32, #tpu.memory_space<vmem>>) attributes {dimension_semantics = [#tpu.dimension_semantics<parallel>], iteration_bounds = array<i64: 2>, scalar_prefetch = 0 : i64, scratch_operands = 0 : i64, tpu.core_type = #tpu.core_type<tc>, window_params = [{transform_indices = @transform_0, window_bounds = array<i64: 4, 8, 16>}, {transform_indices = @transform_1, window_bounds = array<i64: 4, 16, 32>}, {transform_indices = @transform_2, window_bounds = array<i64: 4, 1, 32>}, {transform_indices = @transform_3, window_bounds = array<i64: 4, 32, 8>}, {transform_indices = @transform_4, window_bounds = array<i64: 4, 1, 8>}, {transform_indices = @transform_5, window_bounds = array<i64: 1, 8, 32>}]} {
    %c0 = arith.constant 0 : index
    %c0_0 = arith.constant 0 : index
    %c0_1 = arith.constant 0 : index
    %0 = vector.load %arg1[%c0, %c0_0, %c0_1] : memref<4x8x16xf32, #tpu.memory_space<vmem>>, vector<4x8x16xf32>
    %c0_2 = arith.constant 0 : index
    %c0_3 = arith.constant 0 : index
    %c0_4 = arith.constant 0 : index
    %1 = vector.load %arg2[%c0_2, %c0_3, %c0_4] : memref<4x16x32xf32, #tpu.memory_space<vmem>>, vector<4x16x32xf32>
    %c0_5 = arith.constant 0 : index
    %c0_6 = arith.constant 0 : index
    %c0_7 = arith.constant 0 : index
    %2 = vector.load %arg4[%c0_5, %c0_6, %c0_7] : memref<4x32x8xf32, #tpu.memory_space<vmem>>, vector<4x32x8xf32>
    "tpu.trace_start"() <{level = 10 : i32, message = "pbi,pih->pbh"}> : () -> ()
    %cst = arith.constant dense<0.000000e+00> : vector<4x8x32xf32>
    %3 = tpu.matmul %0, %1, %cst {dimension_numbers = #tpu.dot_dimension_numbers<[2], [1], [1], [2], [0, 0, 0, 1, 1, 2], [0], [0]>} : vector<4x8x16xf32>, vector<4x16x32xf32>, vector<4x8x32xf32> -> vector<4x8x32xf32>
    "tpu.trace_stop"() : () -> ()
    %c0_8 = arith.constant 0 : index
    %c0_9 = arith.constant 0 : index
    %c0_10 = arith.constant 0 : index
    %4 = vector.load %arg3[%c0_8, %c0_9, %c0_10] : memref<4x1x32xf32, #tpu.memory_space<vmem>>, vector<4x1x32xf32>
    %5 = vector.broadcast %4 : vector<4x1x32xf32> to vector<4x8x32xf32>
    %6 = arith.addf %3, %5 : vector<4x8x32xf32>
    %cst_11 = arith.constant 0.00999999977 : f32
    %7 = vector.broadcast %cst_11 : f32 to vector<4x8x32xf32>
    %8 = arith.mulf %7, %6 : vector<4x8x32xf32>
    %9 = arith.maximumf %6, %8 : vector<4x8x32xf32>
    "tpu.trace_start"() <{level = 10 : i32, message = "pbh,pho->pbo"}> : () -> ()
    %cst_12 = arith.constant dense<0.000000e+00> : vector<4x8x8xf32>
    %10 = tpu.matmul %9, %2, %cst_12 {dimension_numbers = #tpu.dot_dimension_numbers<[2], [1], [1], [2], [0, 0, 0, 1, 1, 2], [0], [0]>} : vector<4x8x32xf32>, vector<4x32x8xf32>, vector<4x8x8xf32> -> vector<4x8x8xf32>
    "tpu.trace_stop"() : () -> ()
    %c0_13 = arith.constant 0 : index
    %c0_14 = arith.constant 0 : index
    %c0_15 = arith.constant 0 : index
    %11 = vector.load %arg5[%c0_13, %c0_14, %c0_15] : memref<4x1x8xf32, #tpu.memory_space<vmem>>, vector<4x1x8xf32>
    %12 = vector.broadcast %11 : vector<4x1x8xf32> to vector<4x8x8xf32>
    %13 = arith.addf %10, %12 : vector<4x8x8xf32>
    %14 = tpu.transpose %13, [1, 0, 2] : vector<4x8x8xf32> -> vector<8x4x8xf32>
    %15 = vector.shape_cast %14 : vector<8x4x8xf32> to vector<8x32xf32>
    %c0_16 = arith.constant 0 : index
    %c0_17 = arith.constant 0 : index
    %c0_18 = arith.constant 0 : index
    %16 = vector.load %arg6[%c0_16, %c0_17, %c0_18] : memref<1x8x32xf32, #tpu.memory_space<vmem>>, vector<1x8x32xf32>
    %17 = vector.shape_cast %16 : vector<1x8x32xf32> to vector<8x32xf32>
    %18 = vector.shape_cast %15 : vector<8x32xf32> to vector<1x8x32xf32>
    tpu.vector_store %arg6[%c0_16, %c0_17, %c0_18], %18 {strides = array<i32>} : memref<1x8x32xf32, #tpu.memory_space<vmem>>, vector<1x8x32xf32>,
    return
  }
  func.func @transform_0(%arg0: i32) -> (i32, i32, i32) {
    %c0_i32 = arith.constant 0 : i32
    %c0_i32_0 = arith.constant 0 : i32
    %c0_i32_1 = arith.constant 0 : i32
    return %arg0, %c0_i32, %c0_i32_0 : i32, i32, i32
  }
  func.func @transform_1(%arg0: i32) -> (i32, i32, i32) {
    %c0_i32 = arith.constant 0 : i32
    %c0_i32_0 = arith.constant 0 : i32
    %c0_i32_1 = arith.constant 0 : i32
    return %arg0, %c0_i32, %c0_i32_0 : i32, i32, i32
  }
  func.func @transform_2(%arg0: i32) -> (i32, i32, i32) {
    %c0_i32 = arith.constant 0 : i32
    %c0_i32_0 = arith.constant 0 : i32
    %c0_i32_1 = arith.constant 0 : i32
    return %arg0, %c0_i32, %c0_i32_0 : i32, i32, i32
  }
  func.func @transform_3(%arg0: i32) -> (i32, i32, i32) {
    %c0_i32 = arith.constant 0 : i32
    %c0_i32_0 = arith.constant 0 : i32
    %c0_i32_1 = arith.constant 0 : i32
    return %arg0, %c0_i32, %c0_i32_0 : i32, i32, i32
  }
  func.func @transform_4(%arg0: i32) -> (i32, i32, i32) {
    %c0_i32 = arith.constant 0 : i32
    %c0_i32_0 = arith.constant 0 : i32
    %c0_i32_1 = arith.constant 0 : i32
    return %arg0, %c0_i32, %c0_i32_0 : i32, i32, i32
  }
  func.func @transform_5(%arg0: i32) -> (i32, i32, i32) {
    %c0_i32 = arith.constant 0 : i32
    %c0_i32_0 = arith.constant 0 : i32
    %c0_i32_1 = arith.constant 0 : i32
    return %arg0, %c0_i32, %c0_i32_0 : i32, i32, i32
  }
}

</mosaic_0001>

<llo_original>
// kernel: tpu_custom_call.1
$region0: #{tpu_custom_call.1}
  #allocation0 [shape = 'u32[]', space=smem, size = 0x4, offset = 0x4, fixed_abs, tag = 'smem constant byte address 0x4 - core index']
  #allocation1 [shape = 'u32[144,128]{1,0:T(1,128)}', space=vmem, size = 0x12000, scoped, tag = 'internal scratch']
  %s0 = inlined_call_operand.vmem [shape: f32[8,8,16], index: 0, kind: input, shape index: {}]
  %s1 = inlined_call_operand.vmem [shape: f32[8,16,32], index: 1, kind: input, shape index: {}]
  %s2 = inlined_call_operand.vmem [shape: f32[8,1,32], index: 2, kind: input, shape index: {}]
  %s3 = inlined_call_operand.vmem [shape: f32[8,32,8], index: 3, kind: input, shape index: {}]
  %s4 = inlined_call_operand.vmem [shape: f32[8,1,8], index: 4, kind: input, shape index: {}]
  %s5 = inlined_call_operand.hbm [shape: f32[2,8,32], index: 5, kind: output, shape index: {}]
  %s6 = sld [smem:[#allocation0]]
  $region53: #{tpu_custom_call.1} parent=0
    _
  %s8 = ssub.s32 1, %s6
  %s9 = scalar_select 0, %s8, %s6
  $region1: #{tpu_custom_call.1} parent=0
    #allocation2 [shape = 'u8[8192]{0}', space=vmem, size = 0x2000, scoped, tag = 'output window, operand 0']
    #allocation3 [shape = 's32[2]{0}', space=sflag, size = 0x8, scoped, tag = 'scoped memory for tpu_custom_call.1']
    %10 = vsyncpa [#allocation3], 0
    %s11 = scalar_lea.sflag [#allocation3], 1
    %12 = vsyncpa %s11, 0
    loop: start=0, step=1, limit=4
    $region2: #{tpu_custom_call.1} parent=1 // loop_pre_header
      _
    $region3: #{tpu_custom_call.1} parent=1 // loop_header
      %s14 = sphi 0, %s18
      %p15 = scmp.ge.s32.totalorder %s14, 4
      %s24 = sphi 0, %s26
      %s27 = sphi 0, %s24
      %s28 = sphi 0, %s27
      %s44 = sphi 0, %s28
      %s50 = sphi 0, %s52
      %s53 = sphi 0, %s50
      %s54 = sphi 0, %s53
      %s70 = sphi 0, %s54
      %s76 = sphi 0, %s78
      %s79 = sphi 0, %s76
      %s80 = sphi 0, %s79
      %s96 = sphi 0, %s80
      %s102 = sphi 0, %s104
      %s105 = sphi 0, %s102
      %s106 = sphi 0, %s105
      %s122 = sphi 0, %s106
      %s128 = sphi 0, %s130
      %s131 = sphi 0, %s128
      %s132 = sphi 0, %s131
      %s148 = sphi 0, %s132
      %s154 = sphi 0, %s156
      %s157 = sphi 0, %s154
      %s158 = sphi 0, %s157
      %s174 = sphi 0, %s158
    $region4: #{tpu_custom_call.1} parent=1 // loop_header_branch
      %17 = sbr.rel (%p15) target = $region8
    $region5: #{tpu_custom_call.1} parent=1 // loop_body
      %s19 = ssub.s32 %s14, 1
      %s20 = ssub.s32 %s14, 2
      %s21 = sadd.s32 %s14, 1
      %s22 = ssub.s32 %s14, %s21
      %p23 = scmp.eq.s32.totalorder %s22, 0
      %s25 = sadd.s32 %s24, 1
      %s26 = scalar_select %p23, %s24, %s25
      %p29 = pneg %p23
      %p30 = scmp.eq.s32.totalorder %s14, 1
      %p31 = por %p29, %p30
      %p32 = scmp.ne.s32.totalorder %s24, %s27
      %p33 = scmp.eq.s32.totalorder %s14, 0
      %p34 = por %p32, %p33
      %p35 = scmp.ne.s32.totalorder %s24, %s27
      %p36 = scmp.eq.s32.totalorder %s19, 1
      %p37 = por %p35, %p36
      %p38 = scmp.ne.s32.totalorder %s27, %s28
      %p39 = scmp.eq.s32.totalorder %s19, 0
      %p40 = por %p38, %p39
      %p41 = scmp.ne.s32.totalorder %s27, %s28
      %p42 = scmp.eq.s32.totalorder %s20, 1
      %p43 = por %p41, %p42
      %p45 = scmp.ne.s32.totalorder %s28, %s44
      %p46 = scmp.eq.s32.totalorder %s20, 0
      %p47 = por %p45, %p46
      %s48 = ssub.s32 %s14, %s21
      %p49 = scmp.eq.s32.totalorder %s48, 0
      %s51 = sadd.s32 %s50, 1
      %s52 = scalar_select %p49, %s50, %s51
      %p55 = pneg %p49
      %p56 = scmp.eq.s32.totalorder %s14, 1
      %p57 = por %p55, %p56
      %p58 = scmp.ne.s32.totalorder %s50, %s53
      %p59 = scmp.eq.s32.totalorder %s14, 0
      %p60 = por %p58, %p59
      %p61 = scmp.ne.s32.totalorder %s50, %s53
      %p62 = scmp.eq.s32.totalorder %s19, 1
      %p63 = por %p61, %p62
      %p64 = scmp.ne.s32.totalorder %s53, %s54
      %p65 = scmp.eq.s32.totalorder %s19, 0
      %p66 = por %p64, %p65
      %p67 = scmp.ne.s32.totalorder %s53, %s54
      %p68 = scmp.eq.s32.totalorder %s20, 1
      %p69 = por %p67, %p68
      %p71 = scmp.ne.s32.totalorder %s54, %s70
      %p72 = scmp.eq.s32.totalorder %s20, 0
      %p73 = por %p71, %p72
      %s74 = ssub.s32 %s14, %s21
      %p75 = scmp.eq.s32.totalorder %s74, 0
      %s77 = sadd.s32 %s76, 1
      %s78 = scalar_select %p75, %s76, %s77
      %p81 = pneg %p75
      %p82 = scmp.eq.s32.totalorder %s14, 1
      %p83 = por %p81, %p82
      %p84 = scmp.ne.s32.totalorder %s76, %s79
      %p85 = scmp.eq.s32.totalorder %s14, 0
      %p86 = por %p84, %p85
      %p87 = scmp.ne.s32.totalorder %s76, %s79
      %p88 = scmp.eq.s32.totalorder %s19, 1
      %p89 = por %p87, %p88
      %p90 = scmp.ne.s32.totalorder %s79, %s80
      %p91 = scmp.eq.s32.totalorder %s19, 0
      %p92 = por %p90, %p91
      %p93 = scmp.ne.s32.totalorder %s79, %s80
      %p94 = scmp.eq.s32.totalorder %s20, 1
      %p95 = por %p93, %p94
      %p97 = scmp.ne.s32.totalorder %s80, %s96
      %p98 = scmp.eq.s32.totalorder %s20, 0
      %p99 = por %p97, %p98
      %s100 = ssub.s32 %s14, %s21
      %p101 = scmp.eq.s32.totalorder %s100, 0
      %s103 = sadd.s32 %s102, 1
      %s104 = scalar_select %p101, %s102, %s103
      %p107 = pneg %p101
      %p108 = scmp.eq.s32.totalorder %s14, 1
      %p109 = por %p107, %p108
      %p110 = scmp.ne.s32.totalorder %s102, %s105
      %p111 = scmp.eq.s32.totalorder %s14, 0
      %p112 = por %p110, %p111
      %p113 = scmp.ne.s32.totalorder %s102, %s105
      %p114 = scmp.eq.s32.totalorder %s19, 1
      %p115 = por %p113, %p114
      %p116 = scmp.ne.s32.totalorder %s105, %s106
      %p117 = scmp.eq.s32.totalorder %s19, 0
      %p118 = por %p116, %p117
      %p119 = scmp.ne.s32.totalorder %s105, %s106
      %p120 = scmp.eq.s32.totalorder %s20, 1
      %p121 = por %p119, %p120
      %p123 = scmp.ne.s32.totalorder %s106, %s122
      %p124 = scmp.eq.s32.totalorder %s20, 0
      %p125 = por %p123, %p124
      %s126 = ssub.s32 %s14, %s21
      %p127 = scmp.eq.s32.totalorder %s126, 0
      %s129 = sadd.s32 %s128, 1
      %s130 = scalar_select %p127, %s128, %s129
      %p133 = pneg %p127
      %p134 = scmp.eq.s32.totalorder %s14, 1
      %p135 = por %p133, %p134
      %p136 = scmp.ne.s32.totalorder %s128, %s131
      %p137 = scmp.eq.s32.totalorder %s14, 0
      %p138 = por %p136, %p137
      %p139 = scmp.ne.s32.totalorder %s128, %s131
      %p140 = scmp.eq.s32.totalorder %s19, 1
      %p141 = por %p139, %p140
      %p142 = scmp.ne.s32.totalorder %s131, %s132
      %p143 = scmp.eq.s32.totalorder %s19, 0
      %p144 = por %p142, %p143
      %p145 = scmp.ne.s32.totalorder %s131, %s132
      %p146 = scmp.eq.s32.totalorder %s20, 1
      %p147 = por %p145, %p146
      %p149 = scmp.ne.s32.totalorder %s132, %s148
      %p150 = scmp.eq.s32.totalorder %s20, 0
      %p151 = por %p149, %p150
      %s152 = ssub.s32 %s14, %s21
      %p153 = scmp.eq.s32.totalorder %s152, 0
      %s155 = sadd.s32 %s154, 1
      %s156 = scalar_select %p153, %s154, %s155
      %p159 = pneg %p153
      %p160 = scmp.eq.s32.totalorder %s14, 1
      %p161 = por %p159, %p160
      %p162 = scmp.ne.s32.totalorder %s154, %s157
      %p163 = scmp.eq.s32.totalorder %s14, 0
      %p164 = por %p162, %p163
      %p165 = scmp.ne.s32.totalorder %s154, %s157
      %p166 = scmp.eq.s32.totalorder %s19, 1
      %p167 = por %p165, %p166
      %p168 = scmp.ne.s32.totalorder %s157, %s158
      %p169 = scmp.eq.s32.totalorder %s19, 0
      %p170 = por %p168, %p169
      %p171 = scmp.ne.s32.totalorder %s157, %s158
      %p172 = scmp.eq.s32.totalorder %s20, 1
      %p173 = por %p171, %p172
      %p175 = scmp.ne.s32.totalorder %s158, %s174
      %p176 = scmp.eq.s32.totalorder %s20, 0
      %p177 = por %p175, %p176
      %p178 = scmp.le.s32.totalorder 1, %s14
      %p179 = scmp.lt.s32.totalorder %s14, 3
      %p180 = pnand %p178, %p179
      %p181 = pneg %p180
      // Predicated region
      $region9: #{tpu_custom_call.1} parent=5 // pred_check
        _
      $region10: #{tpu_custom_call.1} parent=5 // pred_check_branch
        %183 = sbr.rel (%p180) target = $region12
      $region11: #{tpu_custom_call.1} parent=5 // pred_region
        %s184 = ssub.s32 %s14, 1
      $region12: #{tpu_custom_call.1} parent=5 // pred_fallthru
        _
      %p185 = scmp.lt.s32.totalorder %s14, 2
      // Predicated region
      $region13: #{tpu_custom_call.1} parent=5 // pred_check
        %p186 = pneg %p185
      $region14: #{tpu_custom_call.1} parent=5 // pred_check_branch
        %188 = sbr.rel (%p186) target = $region16
      $region15: #{tpu_custom_call.1} parent=5 // pred_region
        // Predicated region
        $region17: #{tpu_custom_call.1} parent=15 // pred_check
          %p189 = pneg %p34
        $region18: #{tpu_custom_call.1} parent=15 // pred_check_branch
          %191 = sbr.rel (%p189) target = $region20
        $region19: #{tpu_custom_call.1} parent=15 // pred_region
          %s192 = smul.u32 4, %s14
          %p193 = scmp.lt.s32.totalorder %s192, 7
          %s194 = scalar_select %p193, %s192, 7
          %s195 = smul.addr %s194, 8
          %s196 = scalar_lea.vmem %s0, %s195
          %s197 = smul.u32 4, %s14
        $region20: #{tpu_custom_call.1} parent=15 // pred_fallthru
          _
        // Predicated region
        $region21: #{tpu_custom_call.1} parent=15 // pred_check
          %p198 = pneg %p60
        $region22: #{tpu_custom_call.1} parent=15 // pred_check_branch
          %200 = sbr.rel (%p198) target = $region24
        $region23: #{tpu_custom_call.1} parent=15 // pred_region
          %s201 = smul.u32 4, %s14
          %p202 = scmp.lt.s32.totalorder %s201, 7
          %s203 = scalar_select %p202, %s201, 7
          %s204 = smul.addr %s203, 2
          %s205 = smul.addr %s204, 8
          %s206 = scalar_lea.vmem %s1, %s205
          %s207 = smul.u32 4, %s14
        $region24: #{tpu_custom_call.1} parent=15 // pred_fallthru
          _
        // Predicated region
        $region25: #{tpu_custom_call.1} parent=15 // pred_check
          %p208 = pneg %p86
        $region26: #{tpu_custom_call.1} parent=15 // pred_check_branch
          %210 = sbr.rel (%p208) target = $region28
        $region27: #{tpu_custom_call.1} parent=15 // pred_region
          %s211 = smul.u32 4, %s14
          %p212 = scmp.lt.s32.totalorder %s211, 7
          %s213 = scalar_select %p212, %s211, 7
          %s214 = scalar_lea.vmem %s2, %s213
          %s215 = smul.u32 4, %s14
        $region28: #{tpu_custom_call.1} parent=15 // pred_fallthru
          _
        // Predicated region
        $region29: #{tpu_custom_call.1} parent=15 // pred_check
          %p216 = pneg %p112
        $region30: #{tpu_custom_call.1} parent=15 // pred_check_branch
          %218 = sbr.rel (%p216) target = $region32
        $region31: #{tpu_custom_call.1} parent=15 // pred_region
          %s219 = smul.u32 4, %s14
          %p220 = scmp.lt.s32.totalorder %s219, 7
          %s221 = scalar_select %p220, %s219, 7
          %s222 = smul.addr %s221, 4
          %s223 = smul.addr %s222, 8
          %s224 = scalar_lea.vmem %s3, %s223
          %s225 = smul.u32 4, %s14
        $region32: #{tpu_custom_call.1} parent=15 // pred_fallthru
          _
        // Predicated region
        $region33: #{tpu_custom_call.1} parent=15 // pred_check
          %p226 = pneg %p138
        $region34: #{tpu_custom_call.1} parent=15 // pred_check_branch
          %228 = sbr.rel (%p226) target = $region36
        $region35: #{tpu_custom_call.1} parent=15 // pred_region
          %s229 = smul.u32 4, %s14
          %p230 = scmp.lt.s32.totalorder %s229, 7
          %s231 = scalar_select %p230, %s229, 7
          %s232 = scalar_lea.vmem %s4, %s231
          %s233 = smul.u32 4, %s14
        $region36: #{tpu_custom_call.1} parent=15 // pred_fallthru
          _
      $region16: #{tpu_custom_call.1} parent=5 // pred_fallthru
        _
      %p234 = scmp.le.s32.totalorder 1, %s14
      %p235 = scmp.lt.s32.totalorder %s14, 3
      %p236 = pnand %p234, %p235
      %p237 = pneg %p236
      // Predicated region
      $region37: #{tpu_custom_call.1} parent=5 // pred_check
        _
      $region38: #{tpu_custom_call.1} parent=5 // pred_check_branch
        %239 = sbr.rel (%p236) target = $region40
      $region39: #{tpu_custom_call.1} parent=5 // pred_region
        %s240 = ssub.s32 %s14, 1
        %s241 = smul.u32 4, %s19
        %p242 = scmp.lt.s32.totalorder %s241, 7
        %s243 = scalar_select %p242, %s241, 7
        %s244 = smul.addr %s243, 8
        %s245 = scalar_lea.vmem %s0, %s244
        %p246 = pneg %p40
        %p247 = pneg %p37
        %s248 = smul.u32 4, %s19
        %p249 = scmp.lt.s32.totalorder %s248, 7
        %s250 = scalar_select %p249, %s248, 7
        %s251 = smul.addr %s250, 2
        %s252 = smul.addr %s251, 8
        %s253 = scalar_lea.vmem %s1, %s252
        %p254 = pneg %p66
        %p255 = pneg %p63
        %s256 = smul.u32 4, %s19
        %p257 = scmp.lt.s32.totalorder %s256, 7
        %s258 = scalar_select %p257, %s256, 7
        %s259 = scalar_lea.vmem %s2, %s258
        %p260 = pneg %p92
        %p261 = pneg %p89
        %s262 = smul.u32 4, %s19
        %p263 = scmp.lt.s32.totalorder %s262, 7
        %s264 = scalar_select %p263, %s262, 7
        %s265 = smul.addr %s264, 4
        %s266 = smul.addr %s265, 8
        %s267 = scalar_lea.vmem %s3, %s266
        %p268 = pneg %p118
        %p269 = pneg %p115
        %s270 = smul.u32 4, %s19
        %p271 = scmp.lt.s32.totalorder %s270, 7
        %s272 = scalar_select %p271, %s270, 7
        %s273 = scalar_lea.vmem %s4, %s272
        %p274 = pneg %p144
        %p275 = pneg %p141
        %p276 = pneg %p170
        %p277 = pneg %p167
        %s278 = sand.u32 %s157, 1
        %s279 = scalar_lea.sflag [#allocation3], %s278
        %s280 = sand.u32 %s157, 1
        %s281 = smul.addr %s280, 8
        %s282 = scalar_lea.vmem [#allocation2], %s281
        %s283 = smul.u32 4, %s19
        %p284 = scmp.lt.s32.totalorder %s283, 7
        %s285 = scalar_select %p284, %s283, 7
        %s286 = smul.addr %s285, 8
        %s287 = scalar_lea.vmem %s0, %s286
        %s288 = smul.u32 4, %s19
        %s289 = smul.u32 4, %s19
        %p290 = scmp.lt.s32.totalorder %s289, 7
        %s291 = scalar_select %p290, %s289, 7
        %s292 = smul.addr %s291, 2
        %s293 = smul.addr %s292, 8
        %s294 = scalar_lea.vmem %s1, %s293
        %s295 = smul.u32 4, %s19
        %s296 = smul.u32 4, %s19
        %p297 = scmp.lt.s32.totalorder %s296, 7
        %s298 = scalar_select %p297, %s296, 7
        %s299 = scalar_lea.vmem %s2, %s298
        %s300 = smul.u32 4, %s19
        %s301 = smul.u32 4, %s19
        %p302 = scmp.lt.s32.totalorder %s301, 7
        %s303 = scalar_select %p302, %s301, 7
        %s304 = smul.addr %s303, 4
        %s305 = smul.addr %s304, 8
        %s306 = scalar_lea.vmem %s3, %s305
        %s307 = smul.u32 4, %s19
        %s308 = smul.u32 4, %s19
        %p309 = scmp.lt.s32.totalorder %s308, 7
        %s310 = scalar_select %p309, %s308, 7
        %s311 = scalar_lea.vmem %s4, %s310
        %s312 = smul.u32 4, %s19
        %v313 = vld [vmem:[%s287] sm:$0xff]
        %v314 = vld [vmem:[%s287 + $0x8] sm:$0xff]
        %v315 = vld [vmem:[%s287 + $0x10] sm:$0xff]
        %v316 = vld [vmem:[%s287 + $0x18] sm:$0xff]
        %v317 = vld [vmem:[%s294] sm:$0xff]
        %v318 = vld [vmem:[%s294 + $0x8] sm:$0xff]
        %v319 = vld [vmem:[%s294 + $0x10] sm:$0xff]
        %v320 = vld [vmem:[%s294 + $0x18] sm:$0xff]
        %v321 = vld [vmem:[%s294 + $0x20] sm:$0xff]
        %v322 = vld [vmem:[%s294 + $0x28] sm:$0xff]
        %v323 = vld [vmem:[%s294 + $0x30] sm:$0xff]
        %v324 = vld [vmem:[%s294 + $0x38] sm:$0xff]
        %v325 = vld [vmem:[%s306] sm:$0xff]
        %v326 = vld [vmem:[%s306 + $0x8] sm:$0xff]
        %v327 = vld [vmem:[%s306 + $0x10] sm:$0xff]
        %v328 = vld [vmem:[%s306 + $0x18] sm:$0xff]
        %v329 = vld [vmem:[%s306 + $0x20] sm:$0xff]
        %v330 = vld [vmem:[%s306 + $0x28] sm:$0xff]
        %v331 = vld [vmem:[%s306 + $0x30] sm:$0xff]
        %v332 = vld [vmem:[%s306 + $0x38] sm:$0xff]
        %v333 = vld [vmem:[%s306 + $0x40] sm:$0xff]
        %v334 = vld [vmem:[%s306 + $0x48] sm:$0xff]
        %v335 = vld [vmem:[%s306 + $0x50] sm:$0xff]
        %v336 = vld [vmem:[%s306 + $0x58] sm:$0xff]
        %v337 = vld [vmem:[%s306 + $0x60] sm:$0xff]
        %v338 = vld [vmem:[%s306 + $0x68] sm:$0xff]
        %v339 = vld [vmem:[%s306 + $0x70] sm:$0xff]
        %v340 = vld [vmem:[%s306 + $0x78] sm:$0xff]
        %v341 = vld [vmem:[%s299] sm:$0x1]
        %v342 = vld [vmem:[%s299 + $0x1] sm:$0x1]
        %v343 = vld [vmem:[%s299 + $0x2] sm:$0x1]
        %v344 = vld [vmem:[%s299 + $0x3] sm:$0x1]
        %v349 = vlaneseq
        %v350 = vshrl.u32 %v349, 7
        %v351 = vsub.s32 0, %v350
        %v352 = vrot.slane %v341, %v351
        %v353 = vlaneseq
        %v354 = vshrl.u32 %v353, 7
        %v355 = vsub.s32 0, %v354
        %v356 = vrot.slane %v342, %v355
        %v357 = vlaneseq
        %v358 = vshrl.u32 %v357, 7
        %v359 = vsub.s32 0, %v358
        %v360 = vrot.slane %v343, %v359
        %v361 = vlaneseq
        %v362 = vshrl.u32 %v361, 7
        %v363 = vsub.s32 0, %v362
        %v364 = vrot.slane %v344, %v363
        %vm369 = vcmask 130048
        %v371 = vsel %vm369, %v313, 0
        %373 = vmatprep.subr.mxu0 0.0
        %374 = vmatpush1.msra.mxu0 0.0
        %375 = vmatprep.subr.mxu0 0.0
        %376 = vmatpush1.msra.mxu0 0.0
        %377 = vmatprep.subr.mxu0 0.0
        %378 = vmatpush1.msra.mxu0 0.0
        %379 = vmatprep.subr.mxu0 0.0
        %380 = vmatpush1.msra.mxu0 0.0
        %381 = vmatprep.subr.mxu0 0.0
        %382 = vmatpush1.msra.mxu0 0.0
        %383 = vmatprep.subr.mxu0 0.0
        %384 = vmatpush1.msra.mxu0 0.0
        %385 = vmatprep.subr.mxu0 0.0
        %386 = vmatpush1.msra.mxu0 0.0
        %387 = vmatprep.subr.mxu0 0.0
        %388 = vmatpush1.msra.mxu0 0.0
        %389 = vmatprep.subr.mxu0 0.0
        %390 = vmatpush1.msra.mxu0 0.0
        %391 = vmatprep.subr.mxu0 0.0
        %392 = vmatpush1.msra.mxu0 0.0
        %393 = vmatprep.subr.mxu0 0.0
        %394 = vmatpush1.msra.mxu0 0.0
        %395 = vmatprep.subr.mxu0 0.0
        %396 = vmatpush1.msra.mxu0 0.0
        %397 = vmatprep.subr.mxu0 0.0
        %398 = vmatpush1.msra.mxu0 0.0
        %399 = vmatprep.subr.mxu0 0.0
        %400 = vmatpush1.msra.mxu0 0.0
        %401 = vmatprep.subr.mxu0 0.0
        %402 = vmatpush1.msra.mxu0 %v318
        %403 = vmatprep.subr.mxu0 0.0
        %404 = vmatpush1.msra.mxu0 %v317
        %405 = vmatprep.subr.mxu0 0.0
        %406 = vmatpush2.msra.mxu0 0.0
        %407 = vmatprep.subr.mxu0 0.0
        %408 = vmatpush2.msra.mxu0 0.0
        %409 = vmatprep.subr.mxu0 0.0
        %410 = vmatpush2.msra.mxu0 0.0
        %411 = vmatprep.subr.mxu0 0.0
        %412 = vmatpush2.msra.mxu0 0.0
        %413 = vmatprep.subr.mxu0 0.0
        %414 = vmatpush2.msra.mxu0 0.0
        %415 = vmatprep.subr.mxu0 0.0
        %416 = vmatpush2.msra.mxu0 0.0
        %417 = vmatprep.subr.mxu0 0.0
        %418 = vmatpush2.msra.mxu0 0.0
        %419 = vmatprep.subr.mxu0 0.0
        %420 = vmatpush2.msra.mxu0 0.0
        %421 = vmatprep.subr.mxu0 0.0
        %422 = vmatpush2.msra.mxu0 0.0
        %423 = vmatprep.subr.mxu0 0.0
        %424 = vmatpush2.msra.mxu0 0.0
        %425 = vmatprep.subr.mxu0 0.0
        %426 = vmatpush2.msra.mxu0 0.0
        %427 = vmatprep.subr.mxu0 0.0
        %428 = vmatpush2.msra.mxu0 0.0
        %429 = vmatprep.subr.mxu0 0.0
        %430 = vmatpush2.msra.mxu0 0.0
        %431 = vmatprep.subr.mxu0 0.0
        %432 = vmatpush2.msra.mxu0 0.0
        %433 = vmatprep.subr.mxu0 0.0
        %434 = vmatpush2.msra.mxu0 0.0
        %435 = vmatprep.subr.mxu0 0.0
        %436 = vmatpush2.msra.mxu0 0.0
        %437 = vmatprep.mubr.f32.mxu0 0.0
        %438 = vmatmul.mubr.f32.gmra.mxu0 %v371
        %v439 = vpop.f32.mrf.mxu0
        %v440 = vadd.f32 %v352, %v439
        %v441 = vpop.f32.mrf.mxu0
        %442 = vdwg.mxu0
        %v444 = vsel %vm369, %v314, 0
        %446 = vmatprep.subr.mxu0 0.0
        %447 = vmatpush1.msra.mxu0 0.0
        %448 = vmatprep.subr.mxu0 0.0
        %449 = vmatpush1.msra.mxu0 0.0
        %450 = vmatprep.subr.mxu0 0.0
        %451 = vmatpush1.msra.mxu0 0.0
        %452 = vmatprep.subr.mxu0 0.0
        %453 = vmatpush1.msra.mxu0 0.0
        %454 = vmatprep.subr.mxu0 0.0
        %455 = vmatpush1.msra.mxu0 0.0
        %456 = vmatprep.subr.mxu0 0.0
        %457 = vmatpush1.msra.mxu0 0.0
        %458 = vmatprep.subr.mxu0 0.0
        %459 = vmatpush1.msra.mxu0 0.0
        %460 = vmatprep.subr.mxu0 0.0
        %461 = vmatpush1.msra.mxu0 0.0
        %462 = vmatprep.subr.mxu0 0.0
        %463 = vmatpush1.msra.mxu0 0.0
        %464 = vmatprep.subr.mxu0 0.0
        %465 = vmatpush1.msra.mxu0 0.0
        %466 = vmatprep.subr.mxu0 0.0
        %467 = vmatpush1.msra.mxu0 0.0
        %468 = vmatprep.subr.mxu0 0.0
        %469 = vmatpush1.msra.mxu0 0.0
        %470 = vmatprep.subr.mxu0 0.0
        %471 = vmatpush1.msra.mxu0 0.0
        %472 = vmatprep.subr.mxu0 0.0
        %473 = vmatpush1.msra.mxu0 0.0
        %474 = vmatprep.subr.mxu0 0.0
        %475 = vmatpush1.msra.mxu0 %v320
        %476 = vmatprep.subr.mxu0 0.0
        %477 = vmatpush1.msra.mxu0 %v319
        %478 = vmatprep.subr.mxu0 0.0
        %479 = vmatpush2.msra.mxu0 0.0
        %480 = vmatprep.subr.mxu0 0.0
        %481 = vmatpush2.msra.mxu0 0.0
        %482 = vmatprep.subr.mxu0 0.0
        %483 = vmatpush2.msra.mxu0 0.0
        %484 = vmatprep.subr.mxu0 0.0
        %485 = vmatpush2.msra.mxu0 0.0
        %486 = vmatprep.subr.mxu0 0.0
        %487 = vmatpush2.msra.mxu0 0.0
        %488 = vmatprep.subr.mxu0 0.0
        %489 = vmatpush2.msra.mxu0 0.0
        %490 = vmatprep.subr.mxu0 0.0
        %491 = vmatpush2.msra.mxu0 0.0
        %492 = vmatprep.subr.mxu0 0.0
        %493 = vmatpush2.msra.mxu0 0.0
        %494 = vmatprep.subr.mxu0 0.0
        %495 = vmatpush2.msra.mxu0 0.0
        %496 = vmatprep.subr.mxu0 0.0
        %497 = vmatpush2.msra.mxu0 0.0
        %498 = vmatprep.subr.mxu0 0.0
        %499 = vmatpush2.msra.mxu0 0.0
        %500 = vmatprep.subr.mxu0 0.0
        %501 = vmatpush2.msra.mxu0 0.0
        %502 = vmatprep.subr.mxu0 0.0
        %503 = vmatpush2.msra.mxu0 0.0
        %504 = vmatprep.subr.mxu0 0.0
        %505 = vmatpush2.msra.mxu0 0.0
        %506 = vmatprep.subr.mxu0 0.0
        %507 = vmatpush2.msra.mxu0 0.0
        %508 = vmatprep.subr.mxu0 0.0
        %509 = vmatpush2.msra.mxu0 0.0
        %510 = vmatprep.mubr.f32.mxu0 0.0
        %511 = vmatmul.mubr.f32.gmra.mxu0 %v444
        %v512 = vpop.f32.mrf.mxu0
        %v513 = vadd.f32 %v356, %v512
        %v514 = vpop.f32.mrf.mxu0
        %515 = vdwg.mxu0
        %v517 = vsel %vm369, %v315, 0
        %519 = vmatprep.subr.mxu0 0.0
        %520 = vmatpush1.msra.mxu0 0.0
        %521 = vmatprep.subr.mxu0 0.0
        %522 = vmatpush1.msra.mxu0 0.0
        %523 = vmatprep.subr.mxu0 0.0
        %524 = vmatpush1.msra.mxu0 0.0
        %525 = vmatprep.subr.mxu0 0.0
        %526 = vmatpush1.msra.mxu0 0.0
        %527 = vmatprep.subr.mxu0 0.0
        %528 = vmatpush1.msra.mxu0 0.0
        %529 = vmatprep.subr.mxu0 0.0
        %530 = vmatpush1.msra.mxu0 0.0
        %531 = vmatprep.subr.mxu0 0.0
        %532 = vmatpush1.msra.mxu0 0.0
        %533 = vmatprep.subr.mxu0 0.0
        %534 = vmatpush1.msra.mxu0 0.0
        %535 = vmatprep.subr.mxu0 0.0
        %536 = vmatpush1.msra.mxu0 0.0
        %537 = vmatprep.subr.mxu0 0.0
        %538 = vmatpush1.msra.mxu0 0.0
        %539 = vmatprep.subr.mxu0 0.0
        %540 = vmatpush1.msra.mxu0 0.0
        %541 = vmatprep.subr.mxu0 0.0
        %542 = vmatpush1.msra.mxu0 0.0
        %543 = vmatprep.subr.mxu0 0.0
        %544 = vmatpush1.msra.mxu0 0.0
        %545 = vmatprep.subr.mxu0 0.0
        %546 = vmatpush1.msra.mxu0 0.0
        %547 = vmatprep.subr.mxu0 0.0
        %548 = vmatpush1.msra.mxu0 %v322
        %549 = vmatprep.subr.mxu0 0.0
        %550 = vmatpush1.msra.mxu0 %v321
        %551 = vmatprep.subr.mxu0 0.0
        %552 = vmatpush2.msra.mxu0 0.0
        %553 = vmatprep.subr.mxu0 0.0
        %554 = vmatpush2.msra.mxu0 0.0
        %555 = vmatprep.subr.mxu0 0.0
        %556 = vmatpush2.msra.mxu0 0.0
        %557 = vmatprep.subr.mxu0 0.0
        %558 = vmatpush2.msra.mxu0 0.0
        %559 = vmatprep.subr.mxu0 0.0
        %560 = vmatpush2.msra.mxu0 0.0
        %561 = vmatprep.subr.mxu0 0.0
        %562 = vmatpush2.msra.mxu0 0.0
        %563 = vmatprep.subr.mxu0 0.0
        %564 = vmatpush2.msra.mxu0 0.0
        %565 = vmatprep.subr.mxu0 0.0
        %566 = vmatpush2.msra.mxu0 0.0
        %567 = vmatprep.subr.mxu0 0.0
        %568 = vmatpush2.msra.mxu0 0.0
        %569 = vmatprep.subr.mxu0 0.0
        %570 = vmatpush2.msra.mxu0 0.0
        %571 = vmatprep.subr.mxu0 0.0
        %572 = vmatpush2.msra.mxu0 0.0
        %573 = vmatprep.subr.mxu0 0.0
        %574 = vmatpush2.msra.mxu0 0.0
        %575 = vmatprep.subr.mxu0 0.0
        %576 = vmatpush2.msra.mxu0 0.0
        %577 = vmatprep.subr.mxu0 0.0
        %578 = vmatpush2.msra.mxu0 0.0
        %579 = vmatprep.subr.mxu0 0.0
        %580 = vmatpush2.msra.mxu0 0.0
        %581 = vmatprep.subr.mxu0 0.0
        %582 = vmatpush2.msra.mxu0 0.0
        %583 = vmatprep.mubr.f32.mxu0 0.0
        %584 = vmatmul.mubr.f32.gmra.mxu0 %v517
        %v585 = vpop.f32.mrf.mxu0
        %v586 = vadd.f32 %v360, %v585
        %v587 = vpop.f32.mrf.mxu0
        %588 = vdwg.mxu0
        %v590 = vsel %vm369, %v316, 0
        %592 = vmatprep.subr.mxu0 0.0
        %593 = vmatpush1.msra.mxu0 0.0
        %594 = vmatprep.subr.mxu0 0.0
        %595 = vmatpush1.msra.mxu0 0.0
        %596 = vmatprep.subr.mxu0 0.0
        %597 = vmatpush1.msra.mxu0 0.0
        %598 = vmatprep.subr.mxu0 0.0
        %599 = vmatpush1.msra.mxu0 0.0
        %600 = vmatprep.subr.mxu0 0.0
        %601 = vmatpush1.msra.mxu0 0.0
        %602 = vmatprep.subr.mxu0 0.0
        %603 = vmatpush1.msra.mxu0 0.0
        %604 = vmatprep.subr.mxu0 0.0
        %605 = vmatpush1.msra.mxu0 0.0
        %606 = vmatprep.subr.mxu0 0.0
        %607 = vmatpush1.msra.mxu0 0.0
        %608 = vmatprep.subr.mxu0 0.0
        %609 = vmatpush1.msra.mxu0 0.0
        %610 = vmatprep.subr.mxu0 0.0
        %611 = vmatpush1.msra.mxu0 0.0
        %612 = vmatprep.subr.mxu0 0.0
        %613 = vmatpush1.msra.mxu0 0.0
        %614 = vmatprep.subr.mxu0 0.0
        %615 = vmatpush1.msra.mxu0 0.0
        %616 = vmatprep.subr.mxu0 0.0
        %617 = vmatpush1.msra.mxu0 0.0
        %618 = vmatprep.subr.mxu0 0.0
        %619 = vmatpush1.msra.mxu0 0.0
        %620 = vmatprep.subr.mxu0 0.0
        %621 = vmatpush1.msra.mxu0 %v324
        %622 = vmatprep.subr.mxu0 0.0
        %623 = vmatpush1.msra.mxu0 %v323
        %624 = vmatprep.subr.mxu0 0.0
        %625 = vmatpush2.msra.mxu0 0.0
        %626 = vmatprep.subr.mxu0 0.0
        %627 = vmatpush2.msra.mxu0 0.0
        %628 = vmatprep.subr.mxu0 0.0
        %629 = vmatpush2.msra.mxu0 0.0
        %630 = vmatprep.subr.mxu0 0.0
        %631 = vmatpush2.msra.mxu0 0.0
        %632 = vmatprep.subr.mxu0 0.0
        %633 = vmatpush2.msra.mxu0 0.0
        %634 = vmatprep.subr.mxu0 0.0
        %635 = vmatpush2.msra.mxu0 0.0
        %636 = vmatprep.subr.mxu0 0.0
        %637 = vmatpush2.msra.mxu0 0.0
        %638 = vmatprep.subr.mxu0 0.0
        %639 = vmatpush2.msra.mxu0 0.0
        %640 = vmatprep.subr.mxu0 0.0
        %641 = vmatpush2.msra.mxu0 0.0
        %642 = vmatprep.subr.mxu0 0.0
        %643 = vmatpush2.msra.mxu0 0.0
        %644 = vmatprep.subr.mxu0 0.0
        %645 = vmatpush2.msra.mxu0 0.0
        %646 = vmatprep.subr.mxu0 0.0
        %647 = vmatpush2.msra.mxu0 0.0
        %648 = vmatprep.subr.mxu0 0.0
        %649 = vmatpush2.msra.mxu0 0.0
        %650 = vmatprep.subr.mxu0 0.0
        %651 = vmatpush2.msra.mxu0 0.0
        %652 = vmatprep.subr.mxu0 0.0
        %653 = vmatpush2.msra.mxu0 0.0
        %654 = vmatprep.subr.mxu0 0.0
        %655 = vmatpush2.msra.mxu0 0.0
        %656 = vmatprep.mubr.f32.mxu0 0.0
        %657 = vmatmul.mubr.f32.gmra.mxu0 %v590
        %v658 = vpop.f32.mrf.mxu0
        %v659 = vadd.f32 %v364, %v658
        %v660 = vpop.f32.mrf.mxu0
        %661 = vdwg.mxu0
        %v662 = vmul.f32 %v440, 0.01
        %v663 = vmul.f32 %v513, 0.01
        %v664 = vmul.f32 %v586, 0.01
        %v665 = vmul.f32 %v659, 0.01
        %v666 = vmax.f32 %v440, %v662
        %v667 = vmax.f32 %v513, %v663
        %v668 = vmax.f32 %v586, %v664
        %v669 = vmax.f32 %v659, %v665
        %v670 = vld [vmem:[%s311] sm:$0x1]
        %v671 = vld [vmem:[%s311 + $0x1] sm:$0x1]
        %v672 = vld [vmem:[%s311 + $0x2] sm:$0x1]
        %v673 = vld [vmem:[%s311 + $0x3] sm:$0x1]
        %v678 = vlaneseq
        %v679 = vshrl.u32 %v678, 7
        %v680 = vsub.s32 0, %v679
        %v681 = vrot.slane %v670, %v680
        %v682 = vlaneseq
        %v683 = vshrl.u32 %v682, 7
        %v684 = vsub.s32 0, %v683
        %v685 = vrot.slane %v671, %v684
        %v686 = vlaneseq
        %v687 = vshrl.u32 %v686, 7
        %v688 = vsub.s32 0, %v687
        %v689 = vrot.slane %v672, %v688
        %v690 = vlaneseq
        %v691 = vshrl.u32 %v690, 7
        %v692 = vsub.s32 0, %v691
        %v693 = vrot.slane %v673, %v692
        %vm698 = vcmask 261120
        %v700 = vsel %vm698, %v666, 0
        %702 = vmatprep.subr.mxu0 0.0
        %703 = vmatpush1.msra.mxu0 0.0
        %704 = vmatprep.subr.mxu0 0.0
        %705 = vmatpush1.msra.mxu0 0.0
        %706 = vmatprep.subr.mxu0 0.0
        %707 = vmatpush1.msra.mxu0 0.0
        %708 = vmatprep.subr.mxu0 0.0
        %709 = vmatpush1.msra.mxu0 0.0
        %710 = vmatprep.subr.mxu0 0.0
        %711 = vmatpush1.msra.mxu0 0.0
        %712 = vmatprep.subr.mxu0 0.0
        %713 = vmatpush1.msra.mxu0 0.0
        %714 = vmatprep.subr.mxu0 0.0
        %715 = vmatpush1.msra.mxu0 0.0
        %716 = vmatprep.subr.mxu0 0.0
        %717 = vmatpush1.msra.mxu0 0.0
        %718 = vmatprep.subr.mxu0 0.0
        %719 = vmatpush1.msra.mxu0 0.0
        %720 = vmatprep.subr.mxu0 0.0
        %721 = vmatpush1.msra.mxu0 0.0
        %722 = vmatprep.subr.mxu0 0.0
        %723 = vmatpush1.msra.mxu0 0.0
        %724 = vmatprep.subr.mxu0 0.0
        %725 = vmatpush1.msra.mxu0 0.0
        %726 = vmatprep.subr.mxu0 0.0
        %727 = vmatpush1.msra.mxu0 %v328
        %728 = vmatprep.subr.mxu0 0.0
        %729 = vmatpush1.msra.mxu0 %v327
        %730 = vmatprep.subr.mxu0 0.0
        %731 = vmatpush1.msra.mxu0 %v326
        %732 = vmatprep.subr.mxu0 0.0
        %733 = vmatpush1.msra.mxu0 %v325
        %734 = vmatprep.subr.mxu0 0.0
        %735 = vmatpush2.msra.mxu0 0.0
        %736 = vmatprep.subr.mxu0 0.0
        %737 = vmatpush2.msra.mxu0 0.0
        %738 = vmatprep.subr.mxu0 0.0
        %739 = vmatpush2.msra.mxu0 0.0
        %740 = vmatprep.subr.mxu0 0.0
        %741 = vmatpush2.msra.mxu0 0.0
        %742 = vmatprep.subr.mxu0 0.0
        %743 = vmatpush2.msra.mxu0 0.0
        %744 = vmatprep.subr.mxu0 0.0
        %745 = vmatpush2.msra.mxu0 0.0
        %746 = vmatprep.subr.mxu0 0.0
        %747 = vmatpush2.msra.mxu0 0.0
        %748 = vmatprep.subr.mxu0 0.0
        %749 = vmatpush2.msra.mxu0 0.0
        %750 = vmatprep.subr.mxu0 0.0
        %751 = vmatpush2.msra.mxu0 0.0
        %752 = vmatprep.subr.mxu0 0.0
        %753 = vmatpush2.msra.mxu0 0.0
        %754 = vmatprep.subr.mxu0 0.0
        %755 = vmatpush2.msra.mxu0 0.0
        %756 = vmatprep.subr.mxu0 0.0
        %757 = vmatpush2.msra.mxu0 0.0
        %758 = vmatprep.subr.mxu0 0.0
        %759 = vmatpush2.msra.mxu0 0.0
        %760 = vmatprep.subr.mxu0 0.0
        %761 = vmatpush2.msra.mxu0 0.0
        %762 = vmatprep.subr.mxu0 0.0
        %763 = vmatpush2.msra.mxu0 0.0
        %764 = vmatprep.subr.mxu0 0.0
        %765 = vmatpush2.msra.mxu0 0.0
        %766 = vmatprep.mubr.f32.mxu0 0.0
        %767 = vmatmul.mubr.f32.gmra.mxu0 %v700
        %v768 = vpop.f32.mrf.mxu0
        %v769 = vadd.f32 %v681, %v768
        %v770 = vpop.f32.mrf.mxu0
        %771 = vdwg.mxu0
        %v773 = vsel %vm698, %v667, 0
        %775 = vmatprep.subr.mxu0 0.0
        %776 = vmatpush1.msra.mxu0 0.0
        %777 = vmatprep.subr.mxu0 0.0
        %778 = vmatpush1.msra.mxu0 0.0
        %779 = vmatprep.subr.mxu0 0.0
        %780 = vmatpush1.msra.mxu0 0.0
        %781 = vmatprep.subr.mxu0 0.0
        %782 = vmatpush1.msra.mxu0 0.0
        %783 = vmatprep.subr.mxu0 0.0
        %784 = vmatpush1.msra.mxu0 0.0
        %785 = vmatprep.subr.mxu0 0.0
        %786 = vmatpush1.msra.mxu0 0.0
        %787 = vmatprep.subr.mxu0 0.0
        %788 = vmatpush1.msra.mxu0 0.0
        %789 = vmatprep.subr.mxu0 0.0
        %790 = vmatpush1.msra.mxu0 0.0
        %791 = vmatprep.subr.mxu0 0.0
        %792 = vmatpush1.msra.mxu0 0.0
        %793 = vmatprep.subr.mxu0 0.0
        %794 = vmatpush1.msra.mxu0 0.0
        %795 = vmatprep.subr.mxu0 0.0
        %796 = vmatpush1.msra.mxu0 0.0
        %797 = vmatprep.subr.mxu0 0.0
        %798 = vmatpush1.msra.mxu0 0.0
        %799 = vmatprep.subr.mxu0 0.0
        %800 = vmatpush1.msra.mxu0 %v332
        %801 = vmatprep.subr.mxu0 0.0
        %802 = vmatpush1.msra.mxu0 %v331
        %803 = vmatprep.subr.mxu0 0.0
        %804 = vmatpush1.msra.mxu0 %v330
        %805 = vmatprep.subr.mxu0 0.0
        %806 = vmatpush1.msra.mxu0 %v329
        %807 = vmatprep.subr.mxu0 0.0
        %808 = vmatpush2.msra.mxu0 0.0
        %809 = vmatprep.subr.mxu0 0.0
        %810 = vmatpush2.msra.mxu0 0.0
        %811 = vmatprep.subr.mxu0 0.0
        %812 = vmatpush2.msra.mxu0 0.0
        %813 = vmatprep.subr.mxu0 0.0
        %814 = vmatpush2.msra.mxu0 0.0
        %815 = vmatprep.subr.mxu0 0.0
        %816 = vmatpush2.msra.mxu0 0.0
        %817 = vmatprep.subr.mxu0 0.0
        %818 = vmatpush2.msra.mxu0 0.0
        %819 = vmatprep.subr.mxu0 0.0
        %820 = vmatpush2.msra.mxu0 0.0
        %821 = vmatprep.subr.mxu0 0.0
        %822 = vmatpush2.msra.mxu0 0.0
        %823 = vmatprep.subr.mxu0 0.0
        %824 = vmatpush2.msra.mxu0 0.0
        %825 = vmatprep.subr.mxu0 0.0
        %826 = vmatpush2.msra.mxu0 0.0
        %827 = vmatprep.subr.mxu0 0.0
        %828 = vmatpush2.msra.mxu0 0.0
        %829 = vmatprep.subr.mxu0 0.0
        %830 = vmatpush2.msra.mxu0 0.0
        %831 = vmatprep.subr.mxu0 0.0
        %832 = vmatpush2.msra.mxu0 0.0
        %833 = vmatprep.subr.mxu0 0.0
        %834 = vmatpush2.msra.mxu0 0.0
        %835 = vmatprep.subr.mxu0 0.0
        %836 = vmatpush2.msra.mxu0 0.0
        %837 = vmatprep.subr.mxu0 0.0
        %838 = vmatpush2.msra.mxu0 0.0
        %839 = vmatprep.mubr.f32.mxu0 0.0
        %840 = vmatmul.mubr.f32.gmra.mxu0 %v773
        %v841 = vpop.f32.mrf.mxu0
        %v842 = vadd.f32 %v685, %v841
        %v843 = vpop.f32.mrf.mxu0
        %844 = vdwg.mxu0
        %v846 = vsel %vm698, %v668, 0
        %848 = vmatprep.subr.mxu0 0.0
        %849 = vmatpush1.msra.mxu0 0.0
        %850 = vmatprep.subr.mxu0 0.0
        %851 = vmatpush1.msra.mxu0 0.0
        %852 = vmatprep.subr.mxu0 0.0
        %853 = vmatpush1.msra.mxu0 0.0
        %854 = vmatprep.subr.mxu0 0.0
        %855 = vmatpush1.msra.mxu0 0.0
        %856 = vmatprep.subr.mxu0 0.0
        %857 = vmatpush1.msra.mxu0 0.0
        %858 = vmatprep.subr.mxu0 0.0
        %859 = vmatpush1.msra.mxu0 0.0
        %860 = vmatprep.subr.mxu0 0.0
        %861 = vmatpush1.msra.mxu0 0.0
        %862 = vmatprep.subr.mxu0 0.0
        %863 = vmatpush1.msra.mxu0 0.0
        %864 = vmatprep.subr.mxu0 0.0
        %865 = vmatpush1.msra.mxu0 0.0
        %866 = vmatprep.subr.mxu0 0.0
        %867 = vmatpush1.msra.mxu0 0.0
        %868 = vmatprep.subr.mxu0 0.0
        %869 = vmatpush1.msra.mxu0 0.0
        %870 = vmatprep.subr.mxu0 0.0
        %871 = vmatpush1.msra.mxu0 0.0
        %872 = vmatprep.subr.mxu0 0.0
        %873 = vmatpush1.msra.mxu0 %v336
        %874 = vmatprep.subr.mxu0 0.0
        %875 = vmatpush1.msra.mxu0 %v335
        %876 = vmatprep.subr.mxu0 0.0
        %877 = vmatpush1.msra.mxu0 %v334
        %878 = vmatprep.subr.mxu0 0.0
        %879 = vmatpush1.msra.mxu0 %v333
        %880 = vmatprep.subr.mxu0 0.0
        %881 = vmatpush2.msra.mxu0 0.0
        %882 = vmatprep.subr.mxu0 0.0
        %883 = vmatpush2.msra.mxu0 0.0
        %884 = vmatprep.subr.mxu0 0.0
        %885 = vmatpush2.msra.mxu0 0.0
        %886 = vmatprep.subr.mxu0 0.0
        %887 = vmatpush2.msra.mxu0 0.0
        %888 = vmatprep.subr.mxu0 0.0
        %889 = vmatpush2.msra.mxu0 0.0
        %890 = vmatprep.subr.mxu0 0.0
        %891 = vmatpush2.msra.mxu0 0.0
        %892 = vmatprep.subr.mxu0 0.0
        %893 = vmatpush2.msra.mxu0 0.0
        %894 = vmatprep.subr.mxu0 0.0
        %895 = vmatpush2.msra.mxu0 0.0
        %896 = vmatprep.subr.mxu0 0.0
        %897 = vmatpush2.msra.mxu0 0.0
        %898 = vmatprep.subr.mxu0 0.0
        %899 = vmatpush2.msra.mxu0 0.0
        %900 = vmatprep.subr.mxu0 0.0
        %901 = vmatpush2.msra.mxu0 0.0
        %902 = vmatprep.subr.mxu0 0.0
        %903 = vmatpush2.msra.mxu0 0.0
        %904 = vmatprep.subr.mxu0 0.0
        %905 = vmatpush2.msra.mxu0 0.0
        %906 = vmatprep.subr.mxu0 0.0
        %907 = vmatpush2.msra.mxu0 0.0
        %908 = vmatprep.subr.mxu0 0.0
        %909 = vmatpush2.msra.mxu0 0.0
        %910 = vmatprep.subr.mxu0 0.0
        %911 = vmatpush2.msra.mxu0 0.0
        %912 = vmatprep.mubr.f32.mxu0 0.0
        %913 = vmatmul.mubr.f32.gmra.mxu0 %v846
        %v914 = vpop.f32.mrf.mxu0
        %v915 = vadd.f32 %v689, %v914
        %v916 = vpop.f32.mrf.mxu0
        %917 = vdwg.mxu0
        %v919 = vsel %vm698, %v669, 0
        %921 = vmatprep.subr.mxu0 0.0
        %922 = vmatpush1.msra.mxu0 0.0
        %923 = vmatprep.subr.mxu0 0.0
        %924 = vmatpush1.msra.mxu0 0.0
        %925 = vmatprep.subr.mxu0 0.0
        %926 = vmatpush1.msra.mxu0 0.0
        %927 = vmatprep.subr.mxu0 0.0
        %928 = vmatpush1.msra.mxu0 0.0
        %929 = vmatprep.subr.mxu0 0.0
        %930 = vmatpush1.msra.mxu0 0.0
        %931 = vmatprep.subr.mxu0 0.0
        %932 = vmatpush1.msra.mxu0 0.0
        %933 = vmatprep.subr.mxu0 0.0
        %934 = vmatpush1.msra.mxu0 0.0
        %935 = vmatprep.subr.mxu0 0.0
        %936 = vmatpush1.msra.mxu0 0.0
        %937 = vmatprep.subr.mxu0 0.0
        %938 = vmatpush1.msra.mxu0 0.0
        %939 = vmatprep.subr.mxu0 0.0
        %940 = vmatpush1.msra.mxu0 0.0
        %941 = vmatprep.subr.mxu0 0.0
        %942 = vmatpush1.msra.mxu0 0.0
        %943 = vmatprep.subr.mxu0 0.0
        %944 = vmatpush1.msra.mxu0 0.0
        %945 = vmatprep.subr.mxu0 0.0
        %946 = vmatpush1.msra.mxu0 %v340
        %947 = vmatprep.subr.mxu0 0.0
        %948 = vmatpush1.msra.mxu0 %v339
        %949 = vmatprep.subr.mxu0 0.0
        %950 = vmatpush1.msra.mxu0 %v338
        %951 = vmatprep.subr.mxu0 0.0
        %952 = vmatpush1.msra.mxu0 %v337
        %953 = vmatprep.subr.mxu0 0.0
        %954 = vmatpush2.msra.mxu0 0.0
        %955 = vmatprep.subr.mxu0 0.0
        %956 = vmatpush2.msra.mxu0 0.0
        %957 = vmatprep.subr.mxu0 0.0
        %958 = vmatpush2.msra.mxu0 0.0
        %959 = vmatprep.subr.mxu0 0.0
        %960 = vmatpush2.msra.mxu0 0.0
        %961 = vmatprep.subr.mxu0 0.0
        %962 = vmatpush2.msra.mxu0 0.0
        %963 = vmatprep.subr.mxu0 0.0
        %964 = vmatpush2.msra.mxu0 0.0
        %965 = vmatprep.subr.mxu0 0.0
        %966 = vmatpush2.msra.mxu0 0.0
        %967 = vmatprep.subr.mxu0 0.0
        %968 = vmatpush2.msra.mxu0 0.0
        %969 = vmatprep.subr.mxu0 0.0
        %970 = vmatpush2.msra.mxu0 0.0
        %971 = vmatprep.subr.mxu0 0.0
        %972 = vmatpush2.msra.mxu0 0.0
        %973 = vmatprep.subr.mxu0 0.0
        %974 = vmatpush2.msra.mxu0 0.0
        %975 = vmatprep.subr.mxu0 0.0
        %976 = vmatpush2.msra.mxu0 0.0
        %977 = vmatprep.subr.mxu0 0.0
        %978 = vmatpush2.msra.mxu0 0.0
        %979 = vmatprep.subr.mxu0 0.0
        %980 = vmatpush2.msra.mxu0 0.0
        %981 = vmatprep.subr.mxu0 0.0
        %982 = vmatpush2.msra.mxu0 0.0
        %983 = vmatprep.subr.mxu0 0.0
        %984 = vmatpush2.msra.mxu0 0.0
        %985 = vmatprep.mubr.f32.mxu0 0.0
        %986 = vmatmul.mubr.f32.gmra.mxu0 %v919
        %v987 = vpop.f32.mrf.mxu0
        %v988 = vadd.f32 %v693, %v987
        %v989 = vpop.f32.mrf.mxu0
        %990 = vdwg.mxu0
        %v991 = vcombine.low %v769, %v915
        %v992 = vcombine.high %v769, %v915
        %v994 = vunpack.c.l.s4 1983009808
        %v995 = vunpack.c.0.s8 %v994
        %v996 = vlaneseq
        %v997 = vshrl.u32 %v996, 7
        %v998 = vsub.s32 %v995, %v997
        %v999 = vrot.slane %v991, %v998
        %v1001 = vunpack.c.l.s4 1983009808
        %v1002 = vunpack.c.0.s8 %v1001
        %v1003 = vlaneseq
        %v1004 = vshrl.u32 %v1003, 7
        %v1005 = vsub.s32 %v1002, %v1004
        %v1006 = vrot.slane %v992, %v1005
        %v1007 = vcombine.low %v842, %v988
        %v1008 = vcombine.high %v842, %v988
        %v1010 = vunpack.c.l.s4 1983009808
        %v1011 = vunpack.c.0.s8 %v1010
        %v1012 = vlaneseq
        %v1013 = vshrl.u32 %v1012, 7
        %v1014 = vsub.s32 %v1011, %v1013
        %v1015 = vrot.slane %v1007, %v1014
        %v1017 = vunpack.c.l.s4 1983009808
        %v1018 = vunpack.c.0.s8 %v1017
        %v1019 = vlaneseq
        %v1020 = vshrl.u32 %v1019, 7
        %v1021 = vsub.s32 %v1018, %v1020
        %v1022 = vrot.slane %v1008, %v1021
        %v1023 = vcombine.low %v999, %v1015
        %v1024 = vcombine.high %v999, %v1015
        %v1026 = vunpack.c.l.s4 1934713408
        %v1027 = vunpack.c.0.s8 %v1026
        %v1028 = vlaneseq
        %v1029 = vshrl.u32 %v1028, 7
        %v1030 = vsub.s32 %v1027, %v1029
        %v1031 = vrot.slane %v1023, %v1030
        %v1033 = vunpack.c.l.s4 1934713408
        %v1034 = vunpack.c.0.s8 %v1033
        %v1035 = vlaneseq
        %v1036 = vshrl.u32 %v1035, 7
        %v1037 = vsub.s32 %v1034, %v1036
        %v1038 = vrot.slane %v1024, %v1037
        %v1039 = vcombine.low %v1006, %v1022
        %v1040 = vcombine.high %v1006, %v1022
        %v1042 = vunpack.c.l.s4 1934713408
        %v1043 = vunpack.c.0.s8 %v1042
        %v1044 = vlaneseq
        %v1045 = vshrl.u32 %v1044, 7
        %v1046 = vsub.s32 %v1043, %v1045
        %v1047 = vrot.slane %v1039, %v1046
        %v1049 = vunpack.c.l.s4 1934713408
        %v1050 = vunpack.c.0.s8 %v1049
        %v1051 = vlaneseq
        %v1052 = vshrl.u32 %v1051, 7
        %v1053 = vsub.s32 %v1050, %v1052
        %v1054 = vrot.slane %v1040, %v1053
        %v1055 = vcombine.high %v1031, 0.0
        %v1056 = vcombine.high %v1038, 0.0
        %v1057 = vcombine.high %v1047, 0.0
        %v1058 = vcombine.high %v1054, 0.0
        %v1059 = vcombine.low %v1031, %v1038
        %v1061 = vunpack.c.l.s4 1983009808
        %v1062 = vunpack.c.0.s8 %v1061
        %v1063 = vlaneseq
        %v1064 = vshrl.u32 %v1063, 7
        %v1065 = vsub.s32 %v1062, %v1064
        %v1066 = vrot.slane %v1059, %v1065
        %v1067 = vcombine.low %v1055, %v1056
        %v1069 = vunpack.c.l.s4 1983009808
        %v1070 = vunpack.c.0.s8 %v1069
        %v1071 = vlaneseq
        %v1072 = vshrl.u32 %v1071, 7
        %v1073 = vsub.s32 %v1070, %v1072
        %v1074 = vrot.slane %v1067, %v1073
        %v1075 = vcombine.low %v1047, %v1054
        %v1077 = vunpack.c.l.s4 1983009808
        %v1078 = vunpack.c.0.s8 %v1077
        %v1079 = vlaneseq
        %v1080 = vshrl.u32 %v1079, 7
        %v1081 = vsub.s32 %v1078, %v1080
        %v1082 = vrot.slane %v1075, %v1081
        %v1083 = vcombine.low %v1057, %v1058
        %v1085 = vunpack.c.l.s4 1983009808
        %v1086 = vunpack.c.0.s8 %v1085
        %v1087 = vlaneseq
        %v1088 = vshrl.u32 %v1087, 7
        %v1089 = vsub.s32 %v1086, %v1088
        %v1090 = vrot.slane %v1083, %v1089
        %v1091 = vcombine.low %v1066, %v1074
        %v1092 = vcombine.high %v1066, %v1074
        %v1094 = vunpack.c.l.s4 1934713408
        %v1095 = vunpack.c.0.s8 %v1094
        %v1096 = vlaneseq
        %v1097 = vshrl.u32 %v1096, 7
        %v1098 = vsub.s32 %v1095, %v1097
        %v1099 = vrot.slane %v1091, %v1098
        %v1101 = vunpack.c.l.s4 1934713408
        %v1102 = vunpack.c.0.s8 %v1101
        %v1103 = vlaneseq
        %v1104 = vshrl.u32 %v1103, 7
        %v1105 = vsub.s32 %v1102, %v1104
        %v1106 = vrot.slane %v1092, %v1105
        %v1107 = vcombine.low %v1082, %v1090
        %v1108 = vcombine.high %v1082, %v1090
        %v1110 = vunpack.c.l.s4 1934713408
        %v1111 = vunpack.c.0.s8 %v1110
        %v1112 = vlaneseq
        %v1113 = vshrl.u32 %v1112, 7
        %v1114 = vsub.s32 %v1111, %v1113
        %v1115 = vrot.slane %v1107, %v1114
        %v1117 = vunpack.c.l.s4 1934713408
        %v1118 = vunpack.c.0.s8 %v1117
        %v1119 = vlaneseq
        %v1120 = vshrl.u32 %v1119, 7
        %v1121 = vsub.s32 %v1118, %v1120
        %v1122 = vrot.slane %v1108, %v1121
        %v1123 = vcombine.low %v1099, %v1115
        %v1124 = vcombine.high %v1099, %v1115
        %v1125 = vcombine.low %v1106, %v1122
        %v1126 = vcombine.high %v1106, %v1122
        %1128 = vrot.lane.b32.xlu0 %v1124, 8
        %v1129 = vpop.permute.xlu0 %1128
        %1132 = vrot.lane.b32.xlu0 %v1125, 16
        %v1133 = vpop.permute.xlu0 %1132
        %1136 = vrot.lane.b32.xlu0 %v1126, 24
        %v1137 = vpop.permute.xlu0 %1136
        %vm1139 = vcmask 64512
        %v1140 = vsel %vm1139, %v1123, %v1129
        %v1141 = vsel %vm369, %v1140, %v1133
        %vm1142 = vcmask 195584
        %v1143 = vsel %vm1142, %v1141, %v1137
        %1144 = vst.msk [vmem:[%s282] sm:$0xff] %vm698, %v1143
        %s1145 = sand.u32 %s157, 1
        %s1146 = scalar_lea.sflag [#allocation3], %s1145
        %s1147 = sand.u32 %s157, 1
        %s1148 = smul.addr %s1147, 8
        %s1149 = scalar_lea.vmem [#allocation2], %s1148
        // Predicated region
        $region41: #{tpu_custom_call.1} parent=39 // pred_check
          %p1150 = pneg %p167
        $region42: #{tpu_custom_call.1} parent=39 // pred_check_branch
          %1152 = sbr.rel (%p1150) target = $region44
        $region43: #{tpu_custom_call.1} parent=39 // pred_region
          %s1154 = ssub.s32 128, 128
          %1155 = vsyncadd %s1146, %s1154
          %s1156 = smul.addr %s19, 128
          %s1157 = scalar_lea.hbm %s5, %s1156
          %s1159 = sshll.u32 %s1149, 4
          %s1160 = int_to_ptr.vmem [resolvable:$true] %s1159
          %1162 = dma.vmem_to_hbm [thread:$0]  %s1160, 128, %s1157, %s1146
        $region44: #{tpu_custom_call.1} parent=39 // pred_fallthru
          _
      $region40: #{tpu_custom_call.1} parent=5 // pred_fallthru
        _
      %p1163 = scmp.le.s32.totalorder 2, %s14
      // Predicated region
      $region45: #{tpu_custom_call.1} parent=5 // pred_check
        %p1164 = pneg %p1163
      $region46: #{tpu_custom_call.1} parent=5 // pred_check_branch
        %1166 = sbr.rel (%p1164) target = $region48
      $region47: #{tpu_custom_call.1} parent=5 // pred_region
        %s1167 = ssub.s32 %s14, 2
        // Predicated region
        $region49: #{tpu_custom_call.1} parent=47 // pred_check
          %p1168 = pneg %p173
        $region50: #{tpu_custom_call.1} parent=47 // pred_check_branch
          %1170 = sbr.rel (%p1168) target = $region52
        $region51: #{tpu_custom_call.1} parent=47 // pred_region
          %s1171 = sand.u32 %s158, 1
          %s1172 = scalar_lea.sflag [#allocation3], %s1171
          %s1173 = sand.u32 %s158, 1
          %s1174 = smul.addr %s1173, 8
          %s1175 = scalar_lea.vmem [#allocation2], %s1174
          %1176 = dma.done %s1172, 128
        $region52: #{tpu_custom_call.1} parent=47 // pred_fallthru
          _
      $region48: #{tpu_custom_call.1} parent=5 // pred_fallthru
        _
    $region6: #{tpu_custom_call.1} parent=1 // loop_footer
      %s18 = sadd.s32 1, %s14
    $region7: #{tpu_custom_call.1} parent=1 // loop_footer_branch
      %13 = sbr.rel target = $region3
    $region8: #{tpu_custom_call.1} parent=1 // loop_exit
      _
    %1177 = vsyncpa [#allocation3], 1
    %s1178 = scalar_lea.sflag [#allocation3], 1
    %1179 = vsyncpa %s1178, 1

</llo_original>
